<compile_context>
chip_gen: v6e
topology: v6e:2x2x1
jax: 0.10.0
libtpu: 0.0.40
codegen_flags: <defaults>
</compile_context>

<pallas_src>
from functools import partial
import math

import jax
import jax.numpy as jnp
from jax.experimental import pallas as pl
from jax.experimental.pallas import tpu as pltpu


def sinkhorn_bt_kernel(x_ref, embed_ref, rank4_ref, o_ref, *,
                       eps, max_iter, p, n_players, unroll):
    f32 = jnp.float32
    n, bt = x_ref.shape                      # n == 4 seats, bt = batch lanes
    inv_eps = 1.0 / float(eps)
    log_marg = -math.log(float(n))           # log(1/n): both marginals are uniform

    x = x_ref[...]                           # (4, Bt) int32, lanes = batch

    # --- embedding lookup: unrolled select chain over the (small) player table ---
    strength = jnp.zeros((n, bt), f32)
    for pid in range(n_players):
        strength = jnp.where(x == pid, embed_ref[pid], strength)

    # --- raw = strength @ (4*I - ones) == 4*strength - sum_over_seats(strength) ---
    tot = (strength[0:1] + strength[1:2]) + (strength[2:3] + strength[3:4])   # (1, Bt)
    raw = 4.0 * strength - tot                                                 # (4, Bt)

    # --- min-max normalize scores over the 4 seats (static sublane slices) ---
    s_min = jnp.minimum(jnp.minimum(raw[0:1], raw[1:2]),
                        jnp.minimum(raw[2:3], raw[3:4]))
    s_max = jnp.maximum(jnp.maximum(raw[0:1], raw[1:2]),
                        jnp.maximum(raw[2:3], raw[3:4]))
    s = (raw - s_min) / (s_max - s_min + 1e-6)                                 # (4, Bt)

    # --- eps-scaled negative cost, precomputed ONCE in both layouts so each
    #     Sinkhorn half-step reduces elementwise across 4 lane-dense arrays ---
    def cost(d):
        return d * d if p == 2 else jnp.abs(d) ** p

    inv_span = 1.0 / float(n - 1)
    # n_col[j][i, b] = -|s[i,b] - t_j|^p / eps   (rows = seat i, fixed rank j)
    n_col = [(-inv_eps) * cost(s - j * inv_span) for j in range(n)]
    # n_row[i][j, b] = -|s[i,b] - t_j|^p / eps   (rows = rank j, fixed seat i)
    t_rows = jax.lax.broadcasted_iota(jnp.int32, (n, bt), 0).astype(f32) * inv_span
    n_row = [(-inv_eps) * cost(s[i:i + 1, :] - t_rows) for i in range(n)]

    # --- Sinkhorn iterations on eps-scaled potentials u (seats) / v (ranks) ---
    def lse4(t0, t1, t2, t3):
        m = jnp.maximum(jnp.maximum(t0, t1), jnp.maximum(t2, t3))
        ssum = (jnp.exp(t0 - m) + jnp.exp(t1 - m)) + (jnp.exp(t2 - m) + jnp.exp(t3 - m))
        return jnp.log(ssum) + m

    def one_iter(u, v):
        u = log_marg - lse4(n_col[0] + v[0:1, :], n_col[1] + v[1:2, :],
                            n_col[2] + v[2:3, :], n_col[3] + v[3:4, :])
        v = log_marg - lse4(n_row[0] + u[0:1, :], n_row[1] + u[1:2, :],
                            n_row[2] + u[2:3, :], n_row[3] + u[3:4, :])
        return u, v

    n_outer, n_rem = divmod(int(max_iter), int(unroll))

    def body(_, uv):
        u, v = uv
        for _k in range(int(unroll)):
            u, v = one_iter(u, v)
        return u, v

    u = jnp.zeros((n, bt), f32)
    v = jnp.zeros((n, bt), f32)
    u, v = jax.lax.fori_loop(0, n_outer, body, (u, v))
    for _k in range(n_rem):
        u, v = one_iter(u, v)

    # --- expected ranking point: sum_j exp(negC/eps + u_i + v_j) * (4 * rank_pt_j) ---
    expected = jnp.zeros((n, bt), f32)
    for j in range(n):
        expected = expected + jnp.exp(n_col[j] + u + v[j:j + 1, :]) * rank4_ref[j]

    o_ref[...] = raw + expected                                                # (4, Bt)


def sinkhorn_bt(x, embed_w, rank_pts, *, eps=0.001, max_iter=1000, p=2,
                batch_tile=1024, unroll=4):
    """x: (B, 4) int player indices; embed_w: (n_players,) f32; rank_pts: (4,) f32.
    Returns (B, 4) f32, matching SinkhornBT.forward."""
    B, n = x.shape
    assert n == 4, "SinkhornBT operates on 4-player tables"
    embed_flat = jnp.asarray(embed_w, jnp.float32).reshape(-1)
    n_players = int(embed_flat.shape[0])

    LANE = 128
    b_pad = -(-B // LANE) * LANE
    if b_pad <= batch_tile:
        bt = b_pad
    else:
        bt = batch_tile
        b_pad = -(-b_pad // bt) * bt
    grid = (b_pad // bt,)

    # Batch on lanes: (4, B_pad); padded columns use player 0 (finite, then discarded).
    x_t = jnp.zeros((n, b_pad), jnp.int32).at[:, :B].set(jnp.asarray(x, jnp.int32).T)
    rank4 = 4.0 * jnp.asarray(rank_pts, jnp.float32).reshape(-1)   # fold the *4.0 once

    kernel = partial(sinkhorn_bt_kernel, eps=float(eps), max_iter=int(max_iter),
                     p=int(p), n_players=n_players, unroll=int(unroll))

    out_t = pl.pallas_call(
        kernel,
        out_shape=jax.ShapeDtypeStruct((n, b_pad), jnp.float32),
        grid=grid,
        in_specs=[
            pl.BlockSpec((n, bt), lambda b: (0, b)),                       # X tile (lane-dense)
            pl.BlockSpec(memory_space=pltpu.MemorySpace.SMEM),             # embedding table
            pl.BlockSpec(memory_space=pltpu.MemorySpace.SMEM),             # 4 * rank points
        ],
        out_specs=pl.BlockSpec((n, bt), lambda b: (0, b)),
        compiler_params=pltpu.CompilerParams(
            dimension_semantics=("parallel",)),                            # megacore on v7x
    )(x_t, embed_flat, rank4)

    return out_t.T[:B]


if __name__ == "__main__":
    key = jax.random.PRNGKey(0)
    n_players = 30
    B = 2

    k_emb, k_x = jax.random.split(key)
    # nn.Embedding(n_players, 1) weight ~ N(0, 1), deterministic init
    embed_w = jax.random.normal(k_emb, (n_players,), dtype=jnp.float32)
    # X: (B, 4) player indices
    x = jax.random.randint(k_x, (B, 4), 0, n_players, dtype=jnp.int32)
    # ranking_point constant from the forward pass
    rank_pts = jnp.array([-35.0, -15.0, 5.0, 45.0], dtype=jnp.float32)

    out = sinkhorn_bt(x, embed_w, rank_pts, eps=0.001, max_iter=1000, p=2)
    out = jax.block_until_ready(out)
    assert out.shape == (B, 4)
    assert bool(jnp.all(jnp.isfinite(out)))
    print("KERNEL_OK")
</pallas_src>

<mosaic_0001>
module attributes {stable_mosaic.version = 11 : i64} {
  func.func @sinkhorn_bt_kernel(%arg0: i32, %arg1: memref<4x128xi32, #tpu.memory_space<vmem>>, %arg2: memref<30xf32, #tpu.memory_space<smem>>, %arg3: memref<4xf32, #tpu.memory_space<smem>>, %arg4: memref<4x128xf32, #tpu.memory_space<vmem>>) attributes {dimension_semantics = [#tpu.dimension_semantics<parallel>], iteration_bounds = array<i64: 1>, scalar_prefetch = 0 : i64, scratch_operands = 0 : i64, tpu.core_type = #tpu.core_type<tc>, window_params = [{transform_indices = @transform_0, window_bounds = array<i64: 4, 128>}, {transform_indices = @transform_1, window_bounds = array<i64: 30>}, {transform_indices = @transform_2, window_bounds = array<i64: 4>}, {transform_indices = @transform_3, window_bounds = array<i64: 4, 128>}]} {
    %c0 = arith.constant 0 : index
    %c0_0 = arith.constant 0 : index
    %0 = vector.load %arg1[%c0, %c0_0] : memref<4x128xi32, #tpu.memory_space<vmem>>, vector<4x128xi32>
    %cst = arith.constant 0.000000e+00 : f32
    %1 = vector.broadcast %cst : f32 to vector<4x128xf32>
    %c0_i32 = arith.constant 0 : i32
    %2 = vector.broadcast %c0_i32 : i32 to vector<4x128xi32>
    %3 = arith.cmpi eq, %0, %2 : vector<4x128xi32>
    %c0_1 = arith.constant 0 : index
    %4 = memref.load %arg2[%c0_1] : memref<30xf32, #tpu.memory_space<smem>>
    %5 = vector.broadcast %4 : f32 to vector<4x128xf32>
    %6 = arith.select %3, %5, %1 : vector<4x128xi1>, vector<4x128xf32>
    %c1_i32 = arith.constant 1 : i32
    %7 = vector.broadcast %c1_i32 : i32 to vector<4x128xi32>
    %8 = arith.cmpi eq, %0, %7 : vector<4x128xi32>
    %c1 = arith.constant 1 : index
    %9 = memref.load %arg2[%c1] : memref<30xf32, #tpu.memory_space<smem>>
    %10 = vector.broadcast %9 : f32 to vector<4x128xf32>
    %11 = arith.select %8, %10, %6 : vector<4x128xi1>, vector<4x128xf32>
    %c2_i32 = arith.constant 2 : i32
    %12 = vector.broadcast %c2_i32 : i32 to vector<4x128xi32>
    %13 = arith.cmpi eq, %0, %12 : vector<4x128xi32>
    %c2 = arith.constant 2 : index
    %14 = memref.load %arg2[%c2] : memref<30xf32, #tpu.memory_space<smem>>
    %15 = vector.broadcast %14 : f32 to vector<4x128xf32>
    %16 = arith.select %13, %15, %11 : vector<4x128xi1>, vector<4x128xf32>
    %c3_i32 = arith.constant 3 : i32
    %17 = vector.broadcast %c3_i32 : i32 to vector<4x128xi32>
    %18 = arith.cmpi eq, %0, %17 : vector<4x128xi32>
    %c3 = arith.constant 3 : index
    %19 = memref.load %arg2[%c3] : memref<30xf32, #tpu.memory_space<smem>>
    %20 = vector.broadcast %19 : f32 to vector<4x128xf32>
    %21 = arith.select %18, %20, %16 : vector<4x128xi1>, vector<4x128xf32>
    %c4_i32 = arith.constant 4 : i32
    %22 = vector.broadcast %c4_i32 : i32 to vector<4x128xi32>
    %23 = arith.cmpi eq, %0, %22 : vector<4x128xi32>
    %c4 = arith.constant 4 : index
    %24 = memref.load %arg2[%c4] : memref<30xf32, #tpu.memory_space<smem>>
    %25 = vector.broadcast %24 : f32 to vector<4x128xf32>
    %26 = arith.select %23, %25, %21 : vector<4x128xi1>, vector<4x128xf32>
    %c5_i32 = arith.constant 5 : i32
    %27 = vector.broadcast %c5_i32 : i32 to vector<4x128xi32>
    %28 = arith.cmpi eq, %0, %27 : vector<4x128xi32>
    %c5 = arith.constant 5 : index
    %29 = memref.load %arg2[%c5] : memref<30xf32, #tpu.memory_space<smem>>
    %30 = vector.broadcast %29 : f32 to vector<4x128xf32>
    %31 = arith.select %28, %30, %26 : vector<4x128xi1>, vector<4x128xf32>
    %c6_i32 = arith.constant 6 : i32
    %32 = vector.broadcast %c6_i32 : i32 to vector<4x128xi32>
    %33 = arith.cmpi eq, %0, %32 : vector<4x128xi32>
    %c6 = arith.constant 6 : index
    %34 = memref.load %arg2[%c6] : memref<30xf32, #tpu.memory_space<smem>>
    %35 = vector.broadcast %34 : f32 to vector<4x128xf32>
    %36 = arith.select %33, %35, %31 : vector<4x128xi1>, vector<4x128xf32>
    %c7_i32 = arith.constant 7 : i32
    %37 = vector.broadcast %c7_i32 : i32 to vector<4x128xi32>
    %38 = arith.cmpi eq, %0, %37 : vector<4x128xi32>
    %c7 = arith.constant 7 : index
    %39 = memref.load %arg2[%c7] : memref<30xf32, #tpu.memory_space<smem>>
    %40 = vector.broadcast %39 : f32 to vector<4x128xf32>
    %41 = arith.select %38, %40, %36 : vector<4x128xi1>, vector<4x128xf32>
    %c8_i32 = arith.constant 8 : i32
    %42 = vector.broadcast %c8_i32 : i32 to vector<4x128xi32>
    %43 = arith.cmpi eq, %0, %42 : vector<4x128xi32>
    %c8 = arith.constant 8 : index
    %44 = memref.load %arg2[%c8] : memref<30xf32, #tpu.memory_space<smem>>
    %45 = vector.broadcast %44 : f32 to vector<4x128xf32>
    %46 = arith.select %43, %45, %41 : vector<4x128xi1>, vector<4x128xf32>
    %c9_i32 = arith.constant 9 : i32
    %47 = vector.broadcast %c9_i32 : i32 to vector<4x128xi32>
    %48 = arith.cmpi eq, %0, %47 : vector<4x128xi32>
    %c9 = arith.constant 9 : index
    %49 = memref.load %arg2[%c9] : memref<30xf32, #tpu.memory_space<smem>>
    %50 = vector.broadcast %49 : f32 to vector<4x128xf32>
    %51 = arith.select %48, %50, %46 : vector<4x128xi1>, vector<4x128xf32>
    %c10_i32 = arith.constant 10 : i32
    %52 = vector.broadcast %c10_i32 : i32 to vector<4x128xi32>
    %53 = arith.cmpi eq, %0, %52 : vector<4x128xi32>
    %c10 = arith.constant 10 : index
    %54 = memref.load %arg2[%c10] : memref<30xf32, #tpu.memory_space<smem>>
    %55 = vector.broadcast %54 : f32 to vector<4x128xf32>
    %56 = arith.select %53, %55, %51 : vector<4x128xi1>, vector<4x128xf32>
    %c11_i32 = arith.constant 11 : i32
    %57 = vector.broadcast %c11_i32 : i32 to vector<4x128xi32>
    %58 = arith.cmpi eq, %0, %57 : vector<4x128xi32>
    %c11 = arith.constant 11 : index
    %59 = memref.load %arg2[%c11] : memref<30xf32, #tpu.memory_space<smem>>
    %60 = vector.broadcast %59 : f32 to vector<4x128xf32>
    %61 = arith.select %58, %60, %56 : vector<4x128xi1>, vector<4x128xf32>
    %c12_i32 = arith.constant 12 : i32
    %62 = vector.broadcast %c12_i32 : i32 to vector<4x128xi32>
    %63 = arith.cmpi eq, %0, %62 : vector<4x128xi32>
    %c12 = arith.constant 12 : index
    %64 = memref.load %arg2[%c12] : memref<30xf32, #tpu.memory_space<smem>>
    %65 = vector.broadcast %64 : f32 to vector<4x128xf32>
    %66 = arith.select %63, %65, %61 : vector<4x128xi1>, vector<4x128xf32>
    %c13_i32 = arith.constant 13 : i32
    %67 = vector.broadcast %c13_i32 : i32 to vector<4x128xi32>
    %68 = arith.cmpi eq, %0, %67 : vector<4x128xi32>
    %c13 = arith.constant 13 : index
    %69 = memref.load %arg2[%c13] : memref<30xf32, #tpu.memory_space<smem>>
    %70 = vector.broadcast %69 : f32 to vector<4x128xf32>
    %71 = arith.select %68, %70, %66 : vector<4x128xi1>, vector<4x128xf32>
    %c14_i32 = arith.constant 14 : i32
    %72 = vector.broadcast %c14_i32 : i32 to vector<4x128xi32>
    %73 = arith.cmpi eq, %0, %72 : vector<4x128xi32>
    %c14 = arith.constant 14 : index
    %74 = memref.load %arg2[%c14] : memref<30xf32, #tpu.memory_space<smem>>
    %75 = vector.broadcast %74 : f32 to vector<4x128xf32>
    %76 = arith.select %73, %75, %71 : vector<4x128xi1>, vector<4x128xf32>
    %c15_i32 = arith.constant 15 : i32
    %77 = vector.broadcast %c15_i32 : i32 to vector<4x128xi32>
    %78 = arith.cmpi eq, %0, %77 : vector<4x128xi32>
    %c15 = arith.constant 15 : index
    %79 = memref.load %arg2[%c15] : memref<30xf32, #tpu.memory_space<smem>>
    %80 = vector.broadcast %79 : f32 to vector<4x128xf32>
    %81 = arith.select %78, %80, %76 : vector<4x128xi1>, vector<4x128xf32>
    %c16_i32 = arith.constant 16 : i32
    %82 = vector.broadcast %c16_i32 : i32 to vector<4x128xi32>
    %83 = arith.cmpi eq, %0, %82 : vector<4x128xi32>
    %c16 = arith.constant 16 : index
    %84 = memref.load %arg2[%c16] : memref<30xf32, #tpu.memory_space<smem>>
    %85 = vector.broadcast %84 : f32 to vector<4x128xf32>
    %86 = arith.select %83, %85, %81 : vector<4x128xi1>, vector<4x128xf32>
    %c17_i32 = arith.constant 17 : i32
    %87 = vector.broadcast %c17_i32 : i32 to vector<4x128xi32>
    %88 = arith.cmpi eq, %0, %87 : vector<4x128xi32>
    %c17 = arith.constant 17 : index
    %89 = memref.load %arg2[%c17] : memref<30xf32, #tpu.memory_space<smem>>
    %90 = vector.broadcast %89 : f32 to vector<4x128xf32>
    %91 = arith.select %88, %90, %86 : vector<4x128xi1>, vector<4x128xf32>
    %c18_i32 = arith.constant 18 : i32
    %92 = vector.broadcast %c18_i32 : i32 to vector<4x128xi32>
    %93 = arith.cmpi eq, %0, %92 : vector<4x128xi32>
    %c18 = arith.constant 18 : index
    %94 = memref.load %arg2[%c18] : memref<30xf32, #tpu.memory_space<smem>>
    %95 = vector.broadcast %94 : f32 to vector<4x128xf32>
    %96 = arith.select %93, %95, %91 : vector<4x128xi1>, vector<4x128xf32>
    %c19_i32 = arith.constant 19 : i32
    %97 = vector.broadcast %c19_i32 : i32 to vector<4x128xi32>
    %98 = arith.cmpi eq, %0, %97 : vector<4x128xi32>
    %c19 = arith.constant 19 : index
    %99 = memref.load %arg2[%c19] : memref<30xf32, #tpu.memory_space<smem>>
    %100 = vector.broadcast %99 : f32 to vector<4x128xf32>
    %101 = arith.select %98, %100, %96 : vector<4x128xi1>, vector<4x128xf32>
    %c20_i32 = arith.constant 20 : i32
    %102 = vector.broadcast %c20_i32 : i32 to vector<4x128xi32>
    %103 = arith.cmpi eq, %0, %102 : vector<4x128xi32>
    %c20 = arith.constant 20 : index
    %104 = memref.load %arg2[%c20] : memref<30xf32, #tpu.memory_space<smem>>
    %105 = vector.broadcast %104 : f32 to vector<4x128xf32>
    %106 = arith.select %103, %105, %101 : vector<4x128xi1>, vector<4x128xf32>
    %c21_i32 = arith.constant 21 : i32
    %107 = vector.broadcast %c21_i32 : i32 to vector<4x128xi32>
    %108 = arith.cmpi eq, %0, %107 : vector<4x128xi32>
    %c21 = arith.constant 21 : index
    %109 = memref.load %arg2[%c21] : memref<30xf32, #tpu.memory_space<smem>>
    %110 = vector.broadcast %109 : f32 to vector<4x128xf32>
    %111 = arith.select %108, %110, %106 : vector<4x128xi1>, vector<4x128xf32>
    %c22_i32 = arith.constant 22 : i32
    %112 = vector.broadcast %c22_i32 : i32 to vector<4x128xi32>
    %113 = arith.cmpi eq, %0, %112 : vector<4x128xi32>
    %c22 = arith.constant 22 : index
    %114 = memref.load %arg2[%c22] : memref<30xf32, #tpu.memory_space<smem>>
    %115 = vector.broadcast %114 : f32 to vector<4x128xf32>
    %116 = arith.select %113, %115, %111 : vector<4x128xi1>, vector<4x128xf32>
    %c23_i32 = arith.constant 23 : i32
    %117 = vector.broadcast %c23_i32 : i32 to vector<4x128xi32>
    %118 = arith.cmpi eq, %0, %117 : vector<4x128xi32>
    %c23 = arith.constant 23 : index
    %119 = memref.load %arg2[%c23] : memref<30xf32, #tpu.memory_space<smem>>
    %120 = vector.broadcast %119 : f32 to vector<4x128xf32>
    %121 = arith.select %118, %120, %116 : vector<4x128xi1>, vector<4x128xf32>
    %c24_i32 = arith.constant 24 : i32
    %122 = vector.broadcast %c24_i32 : i32 to vector<4x128xi32>
    %123 = arith.cmpi eq, %0, %122 : vector<4x128xi32>
    %c24 = arith.constant 24 : index
    %124 = memref.load %arg2[%c24] : memref<30xf32, #tpu.memory_space<smem>>
    %125 = vector.broadcast %124 : f32 to vector<4x128xf32>
    %126 = arith.select %123, %125, %121 : vector<4x128xi1>, vector<4x128xf32>
    %c25_i32 = arith.constant 25 : i32
    %127 = vector.broadcast %c25_i32 : i32 to vector<4x128xi32>
    %128 = arith.cmpi eq, %0, %127 : vector<4x128xi32>
    %c25 = arith.constant 25 : index
    %129 = memref.load %arg2[%c25] : memref<30xf32, #tpu.memory_space<smem>>
    %130 = vector.broadcast %129 : f32 to vector<4x128xf32>
    %131 = arith.select %128, %130, %126 : vector<4x128xi1>, vector<4x128xf32>
    %c26_i32 = arith.constant 26 : i32
    %132 = vector.broadcast %c26_i32 : i32 to vector<4x128xi32>
    %133 = arith.cmpi eq, %0, %132 : vector<4x128xi32>
    %c26 = arith.constant 26 : index
    %134 = memref.load %arg2[%c26] : memref<30xf32, #tpu.memory_space<smem>>
    %135 = vector.broadcast %134 : f32 to vector<4x128xf32>
    %136 = arith.select %133, %135, %131 : vector<4x128xi1>, vector<4x128xf32>
    %c27_i32 = arith.constant 27 : i32
    %137 = vector.broadcast %c27_i32 : i32 to vector<4x128xi32>
    %138 = arith.cmpi eq, %0, %137 : vector<4x128xi32>
    %c27 = arith.constant 27 : index
    %139 = memref.load %arg2[%c27] : memref<30xf32, #tpu.memory_space<smem>>
    %140 = vector.broadcast %139 : f32 to vector<4x128xf32>
    %141 = arith.select %138, %140, %136 : vector<4x128xi1>, vector<4x128xf32>
    %c28_i32 = arith.constant 28 : i32
    %142 = vector.broadcast %c28_i32 : i32 to vector<4x128xi32>
    %143 = arith.cmpi eq, %0, %142 : vector<4x128xi32>
    %c28 = arith.constant 28 : index
    %144 = memref.load %arg2[%c28] : memref<30xf32, #tpu.memory_space<smem>>
    %145 = vector.broadcast %144 : f32 to vector<4x128xf32>
    %146 = arith.select %143, %145, %141 : vector<4x128xi1>, vector<4x128xf32>
    %c29_i32 = arith.constant 29 : i32
    %147 = vector.broadcast %c29_i32 : i32 to vector<4x128xi32>
    %148 = arith.cmpi eq, %0, %147 : vector<4x128xi32>
    %c29 = arith.constant 29 : index
    %149 = memref.load %arg2[%c29] : memref<30xf32, #tpu.memory_space<smem>>
    %150 = vector.broadcast %149 : f32 to vector<4x128xf32>
    %151 = arith.select %148, %150, %146 : vector<4x128xi1>, vector<4x128xf32>
    %152 = vector.extract_strided_slice %151 {offsets = [0, 0], sizes = [1, 128], strides = [1, 1]} : vector<4x128xf32> to vector<1x128xf32>
    %153 = vector.extract_strided_slice %151 {offsets = [1, 0], sizes = [1, 128], strides = [1, 1]} : vector<4x128xf32> to vector<1x128xf32>
    %154 = arith.addf %152, %153 : vector<1x128xf32>
    %155 = vector.extract_strided_slice %151 {offsets = [2, 0], sizes = [1, 128], strides = [1, 1]} : vector<4x128xf32> to vector<1x128xf32>
    %156 = vector.extract_strided_slice %151 {offsets = [3, 0], sizes = [1, 128], strides = [1, 1]} : vector<4x128xf32> to vector<1x128xf32>
    %157 = arith.addf %155, %156 : vector<1x128xf32>
    %158 = arith.addf %154, %157 : vector<1x128xf32>
    %cst_2 = arith.constant 4.000000e+00 : f32
    %159 = vector.broadcast %cst_2 : f32 to vector<4x128xf32>
    %160 = arith.mulf %159, %151 : vector<4x128xf32>
    %161 = vector.broadcast %158 : vector<1x128xf32> to vector<4x128xf32>
    %162 = arith.subf %160, %161 : vector<4x128xf32>
    %163 = vector.extract_strided_slice %162 {offsets = [0, 0], sizes = [1, 128], strides = [1, 1]} : vector<4x128xf32> to vector<1x128xf32>
    %164 = vector.extract_strided_slice %162 {offsets = [1, 0], sizes = [1, 128], strides = [1, 1]} : vector<4x128xf32> to vector<1x128xf32>
    %165 = arith.minimumf %163, %164 : vector<1x128xf32>
    %166 = vector.extract_strided_slice %162 {offsets = [2, 0], sizes = [1, 128], strides = [1, 1]} : vector<4x128xf32> to vector<1x128xf32>
    %167 = vector.extract_strided_slice %162 {offsets = [3, 0], sizes = [1, 128], strides = [1, 1]} : vector<4x128xf32> to vector<1x128xf32>
    %168 = arith.minimumf %166, %167 : vector<1x128xf32>
    %169 = arith.minimumf %165, %168 : vector<1x128xf32>
    %170 = vector.extract_strided_slice %162 {offsets = [0, 0], sizes = [1, 128], strides = [1, 1]} : vector<4x128xf32> to vector<1x128xf32>
    %171 = vector.extract_strided_slice %162 {offsets = [1, 0], sizes = [1, 128], strides = [1, 1]} : vector<4x128xf32> to vector<1x128xf32>
    %172 = arith.maximumf %170, %171 : vector<1x128xf32>
    %173 = vector.extract_strided_slice %162 {offsets = [2, 0], sizes = [1, 128], strides = [1, 1]} : vector<4x128xf32> to vector<1x128xf32>
    %174 = vector.extract_strided_slice %162 {offsets = [3, 0], sizes = [1, 128], strides = [1, 1]} : vector<4x128xf32> to vector<1x128xf32>
    %175 = arith.maximumf %173, %174 : vector<1x128xf32>
    %176 = arith.maximumf %172, %175 : vector<1x128xf32>
    %177 = vector.broadcast %169 : vector<1x128xf32> to vector<4x128xf32>
    %178 = arith.subf %162, %177 : vector<4x128xf32>
    %179 = arith.subf %176, %169 : vector<1x128xf32>
    %cst_3 = arith.constant 9.99999997E-7 : f32
    %180 = vector.broadcast %cst_3 : f32 to vector<1x128xf32>
    %181 = arith.addf %179, %180 : vector<1x128xf32>
    %182 = vector.broadcast %181 : vector<1x128xf32> to vector<4x128xf32>
    %183 = arith.divf %178, %182 : vector<4x128xf32>
    %cst_4 = arith.constant 0.000000e+00 : f32
    %184 = vector.broadcast %cst_4 : f32 to vector<4x128xf32>
    %185 = arith.subf %183, %184 : vector<4x128xf32>
    %186 = arith.mulf %185, %185 : vector<4x128xf32>
    %cst_5 = arith.constant -1.000000e+03 : f32
    %187 = vector.broadcast %cst_5 : f32 to vector<4x128xf32>
    %188 = arith.mulf %187, %186 : vector<4x128xf32>
    %cst_6 = arith.constant 0.333333343 : f32
    %189 = vector.broadcast %cst_6 : f32 to vector<4x128xf32>
    %190 = arith.subf %183, %189 : vector<4x128xf32>
    %191 = arith.mulf %190, %190 : vector<4x128xf32>
    %cst_7 = arith.constant -1.000000e+03 : f32
    %192 = vector.broadcast %cst_7 : f32 to vector<4x128xf32>
    %193 = arith.mulf %192, %191 : vector<4x128xf32>
    %cst_8 = arith.constant 0.666666686 : f32
    %194 = vector.broadcast %cst_8 : f32 to vector<4x128xf32>
    %195 = arith.subf %183, %194 : vector<4x128xf32>
    %196 = arith.mulf %195, %195 : vector<4x128xf32>
    %cst_9 = arith.constant -1.000000e+03 : f32
    %197 = vector.broadcast %cst_9 : f32 to vector<4x128xf32>
    %198 = arith.mulf %197, %196 : vector<4x128xf32>
    %cst_10 = arith.constant 1.000000e+00 : f32
    %199 = vector.broadcast %cst_10 : f32 to vector<4x128xf32>
    %200 = arith.subf %183, %199 : vector<4x128xf32>
    %201 = arith.mulf %200, %200 : vector<4x128xf32>
    %cst_11 = arith.constant -1.000000e+03 : f32
    %202 = vector.broadcast %cst_11 : f32 to vector<4x128xf32>
    %203 = arith.mulf %202, %201 : vector<4x128xf32>
    %204 = tpu.iota {dimensions = array<i32: 0>} : vector<4x128xi32>
    %205 = arith.sitofp %204 : vector<4x128xi32> to vector<4x128xf32>
    %cst_12 = arith.constant 0.333333343 : f32
    %206 = vector.broadcast %cst_12 : f32 to vector<4x128xf32>
    %207 = arith.mulf %205, %206 : vector<4x128xf32>
    %208 = vector.extract_strided_slice %183 {offsets = [0, 0], sizes = [1, 128], strides = [1, 1]} : vector<4x128xf32> to vector<1x128xf32>
    %209 = vector.broadcast %208 : vector<1x128xf32> to vector<4x128xf32>
    %210 = arith.subf %209, %207 : vector<4x128xf32>
    %211 = arith.mulf %210, %210 : vector<4x128xf32>
    %cst_13 = arith.constant -1.000000e+03 : f32
    %212 = vector.broadcast %cst_13 : f32 to vector<4x128xf32>
    %213 = arith.mulf %212, %211 : vector<4x128xf32>
    %214 = vector.extract_strided_slice %183 {offsets = [1, 0], sizes = [1, 128], strides = [1, 1]} : vector<4x128xf32> to vector<1x128xf32>
    %215 = vector.broadcast %214 : vector<1x128xf32> to vector<4x128xf32>
    %216 = arith.subf %215, %207 : vector<4x128xf32>
    %217 = arith.mulf %216, %216 : vector<4x128xf32>
    %cst_14 = arith.constant -1.000000e+03 : f32
    %218 = vector.broadcast %cst_14 : f32 to vector<4x128xf32>
    %219 = arith.mulf %218, %217 : vector<4x128xf32>
    %220 = vector.extract_strided_slice %183 {offsets = [2, 0], sizes = [1, 128], strides = [1, 1]} : vector<4x128xf32> to vector<1x128xf32>
    %221 = vector.broadcast %220 : vector<1x128xf32> to vector<4x128xf32>
    %222 = arith.subf %221, %207 : vector<4x128xf32>
    %223 = arith.mulf %222, %222 : vector<4x128xf32>
    %cst_15 = arith.constant -1.000000e+03 : f32
    %224 = vector.broadcast %cst_15 : f32 to vector<4x128xf32>
    %225 = arith.mulf %224, %223 : vector<4x128xf32>
    %226 = vector.extract_strided_slice %183 {offsets = [3, 0], sizes = [1, 128], strides = [1, 1]} : vector<4x128xf32> to vector<1x128xf32>
    %227 = vector.broadcast %226 : vector<1x128xf32> to vector<4x128xf32>
    %228 = arith.subf %227, %207 : vector<4x128xf32>
    %229 = arith.mulf %228, %228 : vector<4x128xf32>
    %cst_16 = arith.constant -1.000000e+03 : f32
    %230 = vector.broadcast %cst_16 : f32 to vector<4x128xf32>
    %231 = arith.mulf %230, %229 : vector<4x128xf32>
    %cst_17 = arith.constant 0.000000e+00 : f32
    %232 = vector.broadcast %cst_17 : f32 to vector<4x128xf32>
    %cst_18 = arith.constant 0.000000e+00 : f32
    %233 = vector.broadcast %cst_18 : f32 to vector<4x128xf32>
    %c0_i32_19 = arith.constant 0 : i32
    %c250_i32 = arith.constant 250 : i32
    %234 = arith.addi %c0_i32_19, %c250_i32 : i32
    %c1_i32_20 = arith.constant 1 : i32
    %235:2 = scf.for %arg5 = %c0_i32_19 to %234 step %c1_i32_20 iter_args(%arg6 = %232, %arg7 = %233) -> (vector<4x128xf32>, vector<4x128xf32>)  : i32 {
      %275 = vector.extract_strided_slice %arg7 {offsets = [0, 0], sizes = [1, 128], strides = [1, 1]} : vector<4x128xf32> to vector<1x128xf32>
      %276 = vector.broadcast %275 : vector<1x128xf32> to vector<4x128xf32>
      %277 = arith.addf %188, %276 : vector<4x128xf32>
      %278 = vector.extract_strided_slice %arg7 {offsets = [1, 0], sizes = [1, 128], strides = [1, 1]} : vector<4x128xf32> to vector<1x128xf32>
      %279 = vector.broadcast %278 : vector<1x128xf32> to vector<4x128xf32>
      %280 = arith.addf %193, %279 : vector<4x128xf32>
      %281 = vector.extract_strided_slice %arg7 {offsets = [2, 0], sizes = [1, 128], strides = [1, 1]} : vector<4x128xf32> to vector<1x128xf32>
      %282 = vector.broadcast %281 : vector<1x128xf32> to vector<4x128xf32>
      %283 = arith.addf %198, %282 : vector<4x128xf32>
      %284 = vector.extract_strided_slice %arg7 {offsets = [3, 0], sizes = [1, 128], strides = [1, 1]} : vector<4x128xf32> to vector<1x128xf32>
      %285 = vector.broadcast %284 : vector<1x128xf32> to vector<4x128xf32>
      %286 = arith.addf %203, %285 : vector<4x128xf32>
      %287 = arith.maximumf %277, %280 : vector<4x128xf32>
      %288 = arith.maximumf %283, %286 : vector<4x128xf32>
      %289 = arith.maximumf %287, %288 : vector<4x128xf32>
      %290 = arith.subf %277, %289 : vector<4x128xf32>
      %291 = math.exp %290 : vector<4x128xf32>
      %292 = arith.subf %280, %289 : vector<4x128xf32>
      %293 = math.exp %292 : vector<4x128xf32>
      %294 = arith.addf %291, %293 : vector<4x128xf32>
      %295 = arith.subf %283, %289 : vector<4x128xf32>
      %296 = math.exp %295 : vector<4x128xf32>
      %297 = arith.subf %286, %289 : vector<4x128xf32>
      %298 = math.exp %297 : vector<4x128xf32>
      %299 = arith.addf %296, %298 : vector<4x128xf32>
      %300 = arith.addf %294, %299 : vector<4x128xf32>
      %301 = math.log %300 : vector<4x128xf32>
      %302 = arith.addf %301, %289 : vector<4x128xf32>
      %cst_28 = arith.constant -1.38629436 : f32
      %303 = vector.broadcast %cst_28 : f32 to vector<4x128xf32>
      %304 = arith.subf %303, %302 : vector<4x128xf32>
      %305 = vector.extract_strided_slice %304 {offsets = [0, 0], sizes = [1, 128], strides = [1, 1]} : vector<4x128xf32> to vector<1x128xf32>
      %306 = vector.broadcast %305 : vector<1x128xf32> to vector<4x128xf32>
      %307 = arith.addf %213, %306 : vector<4x128xf32>
      %308 = vector.extract_strided_slice %304 {offsets = [1, 0], sizes = [1, 128], strides = [1, 1]} : vector<4x128xf32> to vector<1x128xf32>
      %309 = vector.broadcast %308 : vector<1x128xf32> to vector<4x128xf32>
      %310 = arith.addf %219, %309 : vector<4x128xf32>
      %311 = vector.extract_strided_slice %304 {offsets = [2, 0], sizes = [1, 128], strides = [1, 1]} : vector<4x128xf32> to vector<1x128xf32>
      %312 = vector.broadcast %311 : vector<1x128xf32> to vector<4x128xf32>
      %313 = arith.addf %225, %312 : vector<4x128xf32>
      %314 = vector.extract_strided_slice %304 {offsets = [3, 0], sizes = [1, 128], strides = [1, 1]} : vector<4x128xf32> to vector<1x128xf32>
      %315 = vector.broadcast %314 : vector<1x128xf32> to vector<4x128xf32>
      %316 = arith.addf %231, %315 : vector<4x128xf32>
      %317 = arith.maximumf %307, %310 : vector<4x128xf32>
      %318 = arith.maximumf %313, %316 : vector<4x128xf32>
      %319 = arith.maximumf %317, %318 : vector<4x128xf32>
      %320 = arith.subf %307, %319 : vector<4x128xf32>
      %321 = math.exp %320 : vector<4x128xf32>
      %322 = arith.subf %310, %319 : vector<4x128xf32>
      %323 = math.exp %322 : vector<4x128xf32>
      %324 = arith.addf %321, %323 : vector<4x128xf32>
      %325 = arith.subf %313, %319 : vector<4x128xf32>
      %326 = math.exp %325 : vector<4x128xf32>
      %327 = arith.subf %316, %319 : vector<4x128xf32>
      %328 = math.exp %327 : vector<4x128xf32>
      %329 = arith.addf %326, %328 : vector<4x128xf32>
      %330 = arith.addf %324, %329 : vector<4x128xf32>
      %331 = math.log %330 : vector<4x128xf32>
      %332 = arith.addf %331, %319 : vector<4x128xf32>
      %cst_29 = arith.constant -1.38629436 : f32
      %333 = vector.broadcast %cst_29 : f32 to vector<4x128xf32>
      %334 = arith.subf %333, %332 : vector<4x128xf32>
      %335 = vector.extract_strided_slice %334 {offsets = [0, 0], sizes = [1, 128], strides = [1, 1]} : vector<4x128xf32> to vector<1x128xf32>
      %336 = vector.broadcast %335 : vector<1x128xf32> to vector<4x128xf32>
      %337 = arith.addf %188, %336 : vector<4x128xf32>
      %338 = vector.extract_strided_slice %334 {offsets = [1, 0], sizes = [1, 128], strides = [1, 1]} : vector<4x128xf32> to vector<1x128xf32>
      %339 = vector.broadcast %338 : vector<1x128xf32> to vector<4x128xf32>
      %340 = arith.addf %193, %339 : vector<4x128xf32>
      %341 = vector.extract_strided_slice %334 {offsets = [2, 0], sizes = [1, 128], strides = [1, 1]} : vector<4x128xf32> to vector<1x128xf32>
      %342 = vector.broadcast %341 : vector<1x128xf32> to vector<4x128xf32>
      %343 = arith.addf %198, %342 : vector<4x128xf32>
      %344 = vector.extract_strided_slice %334 {offsets = [3, 0], sizes = [1, 128], strides = [1, 1]} : vector<4x128xf32> to vector<1x128xf32>
      %345 = vector.broadcast %344 : vector<1x128xf32> to vector<4x128xf32>
      %346 = arith.addf %203, %345 : vector<4x128xf32>
      %347 = arith.maximumf %337, %340 : vector<4x128xf32>
      %348 = arith.maximumf %343, %346 : vector<4x128xf32>
      %349 = arith.maximumf %347, %348 : vector<4x128xf32>
      %350 = arith.subf %337, %349 : vector<4x128xf32>
      %351 = math.exp %350 : vector<4x128xf32>
      %352 = arith.subf %340, %349 : vector<4x128xf32>
      %353 = math.exp %352 : vector<4x128xf32>
      %354 = arith.addf %351, %353 : vector<4x128xf32>
      %355 = arith.subf %343, %349 : vector<4x128xf32>
      %356 = math.exp %355 : vector<4x128xf32>
      %357 = arith.subf %346, %349 : vector<4x128xf32>
      %358 = math.exp %357 : vector<4x128xf32>
      %359 = arith.addf %356, %358 : vector<4x128xf32>
      %360 = arith.addf %354, %359 : vector<4x128xf32>
      %361 = math.log %360 : vector<4x128xf32>
      %362 = arith.addf %361, %349 : vector<4x128xf32>
      %cst_30 = arith.constant -1.38629436 : f32
      %363 = vector.broadcast %cst_30 : f32 to vector<4x128xf32>
      %364 = arith.subf %363, %362 : vector<4x128xf32>
      %365 = vector.extract_strided_slice %364 {offsets = [0, 0], sizes = [1, 128], strides = [1, 1]} : vector<4x128xf32> to vector<1x128xf32>
      %366 = vector.broadcast %365 : vector<1x128xf32> to vector<4x128xf32>
      %367 = arith.addf %213, %366 : vector<4x128xf32>
      %368 = vector.extract_strided_slice %364 {offsets = [1, 0], sizes = [1, 128], strides = [1, 1]} : vector<4x128xf32> to vector<1x128xf32>
      %369 = vector.broadcast %368 : vector<1x128xf32> to vector<4x128xf32>
      %370 = arith.addf %219, %369 : vector<4x128xf32>
      %371 = vector.extract_strided_slice %364 {offsets = [2, 0], sizes = [1, 128], strides = [1, 1]} : vector<4x128xf32> to vector<1x128xf32>
      %372 = vector.broadcast %371 : vector<1x128xf32> to vector<4x128xf32>
      %373 = arith.addf %225, %372 : vector<4x128xf32>
      %374 = vector.extract_strided_slice %364 {offsets = [3, 0], sizes = [1, 128], strides = [1, 1]} : vector<4x128xf32> to vector<1x128xf32>
      %375 = vector.broadcast %374 : vector<1x128xf32> to vector<4x128xf32>
      %376 = arith.addf %231, %375 : vector<4x128xf32>
      %377 = arith.maximumf %367, %370 : vector<4x128xf32>
      %378 = arith.maximumf %373, %376 : vector<4x128xf32>
      %379 = arith.maximumf %377, %378 : vector<4x128xf32>
      %380 = arith.subf %367, %379 : vector<4x128xf32>
      %381 = math.exp %380 : vector<4x128xf32>
      %382 = arith.subf %370, %379 : vector<4x128xf32>
      %383 = math.exp %382 : vector<4x128xf32>
      %384 = arith.addf %381, %383 : vector<4x128xf32>
      %385 = arith.subf %373, %379 : vector<4x128xf32>
      %386 = math.exp %385 : vector<4x128xf32>
      %387 = arith.subf %376, %379 : vector<4x128xf32>
      %388 = math.exp %387 : vector<4x128xf32>
      %389 = arith.addf %386, %388 : vector<4x128xf32>
      %390 = arith.addf %384, %389 : vector<4x128xf32>
      %391 = math.log %390 : vector<4x128xf32>
      %392 = arith.addf %391, %379 : vector<4x128xf32>
      %cst_31 = arith.constant -1.38629436 : f32
      %393 = vector.broadcast %cst_31 : f32 to vector<4x128xf32>
      %394 = arith.subf %393, %392 : vector<4x128xf32>
      %395 = vector.extract_strided_slice %394 {offsets = [0, 0], sizes = [1, 128], strides = [1, 1]} : vector<4x128xf32> to vector<1x128xf32>
      %396 = vector.broadcast %395 : vector<1x128xf32> to vector<4x128xf32>
      %397 = arith.addf %188, %396 : vector<4x128xf32>
      %398 = vector.extract_strided_slice %394 {offsets = [1, 0], sizes = [1, 128], strides = [1, 1]} : vector<4x128xf32> to vector<1x128xf32>
      %399 = vector.broadcast %398 : vector<1x128xf32> to vector<4x128xf32>
      %400 = arith.addf %193, %399 : vector<4x128xf32>
      %401 = vector.extract_strided_slice %394 {offsets = [2, 0], sizes = [1, 128], strides = [1, 1]} : vector<4x128xf32> to vector<1x128xf32>
      %402 = vector.broadcast %401 : vector<1x128xf32> to vector<4x128xf32>
      %403 = arith.addf %198, %402 : vector<4x128xf32>
      %404 = vector.extract_strided_slice %394 {offsets = [3, 0], sizes = [1, 128], strides = [1, 1]} : vector<4x128xf32> to vector<1x128xf32>
      %405 = vector.broadcast %404 : vector<1x128xf32> to vector<4x128xf32>
      %406 = arith.addf %203, %405 : vector<4x128xf32>
      %407 = arith.maximumf %397, %400 : vector<4x128xf32>
      %408 = arith.maximumf %403, %406 : vector<4x128xf32>
      %409 = arith.maximumf %407, %408 : vector<4x128xf32>
      %410 = arith.subf %397, %409 : vector<4x128xf32>
      %411 = math.exp %410 : vector<4x128xf32>
      %412 = arith.subf %400, %409 : vector<4x128xf32>
      %413 = math.exp %412 : vector<4x128xf32>
      %414 = arith.addf %411, %413 : vector<4x128xf32>
      %415 = arith.subf %403, %409 : vector<4x128xf32>
      %416 = math.exp %415 : vector<4x128xf32>
      %417 = arith.subf %406, %409 : vector<4x128xf32>
      %418 = math.exp %417 : vector<4x128xf32>
      %419 = arith.addf %416, %418 : vector<4x128xf32>
      %420 = arith.addf %414, %419 : vector<4x128xf32>
      %421 = math.log %420 : vector<4x128xf32>
      %422 = arith.addf %421, %409 : vector<4x128xf32>
      %cst_32 = arith.constant -1.38629436 : f32
      %423 = vector.broadcast %cst_32 : f32 to vector<4x128xf32>
      %424 = arith.subf %423, %422 : vector<4x128xf32>
      %425 = vector.extract_strided_slice %424 {offsets = [0, 0], sizes = [1, 128], strides = [1, 1]} : vector<4x128xf32> to vector<1x128xf32>
      %426 = vector.broadcast %425 : vector<1x128xf32> to vector<4x128xf32>
      %427 = arith.addf %213, %426 : vector<4x128xf32>
      %428 = vector.extract_strided_slice %424 {offsets = [1, 0], sizes = [1, 128], strides = [1, 1]} : vector<4x128xf32> to vector<1x128xf32>
      %429 = vector.broadcast %428 : vector<1x128xf32> to vector<4x128xf32>
      %430 = arith.addf %219, %429 : vector<4x128xf32>
      %431 = vector.extract_strided_slice %424 {offsets = [2, 0], sizes = [1, 128], strides = [1, 1]} : vector<4x128xf32> to vector<1x128xf32>
      %432 = vector.broadcast %431 : vector<1x128xf32> to vector<4x128xf32>
      %433 = arith.addf %225, %432 : vector<4x128xf32>
      %434 = vector.extract_strided_slice %424 {offsets = [3, 0], sizes = [1, 128], strides = [1, 1]} : vector<4x128xf32> to vector<1x128xf32>
      %435 = vector.broadcast %434 : vector<1x128xf32> to vector<4x128xf32>
      %436 = arith.addf %231, %435 : vector<4x128xf32>
      %437 = arith.maximumf %427, %430 : vector<4x128xf32>
      %438 = arith.maximumf %433, %436 : vector<4x128xf32>
      %439 = arith.maximumf %437, %438 : vector<4x128xf32>
      %440 = arith.subf %427, %439 : vector<4x128xf32>
      %441 = math.exp %440 : vector<4x128xf32>
      %442 = arith.subf %430, %439 : vector<4x128xf32>
      %443 = math.exp %442 : vector<4x128xf32>
      %444 = arith.addf %441, %443 : vector<4x128xf32>
      %445 = arith.subf %433, %439 : vector<4x128xf32>
      %446 = math.exp %445 : vector<4x128xf32>
      %447 = arith.subf %436, %439 : vector<4x128xf32>
      %448 = math.exp %447 : vector<4x128xf32>
      %449 = arith.addf %446, %448 : vector<4x128xf32>
      %450 = arith.addf %444, %449 : vector<4x128xf32>
      %451 = math.log %450 : vector<4x128xf32>
      %452 = arith.addf %451, %439 : vector<4x128xf32>
      %cst_33 = arith.constant -1.38629436 : f32
      %453 = vector.broadcast %cst_33 : f32 to vector<4x128xf32>
      %454 = arith.subf %453, %452 : vector<4x128xf32>
      %455 = vector.extract_strided_slice %454 {offsets = [0, 0], sizes = [1, 128], strides = [1, 1]} : vector<4x128xf32> to vector<1x128xf32>
      %456 = vector.broadcast %455 : vector<1x128xf32> to vector<4x128xf32>
      %457 = arith.addf %188, %456 : vector<4x128xf32>
      %458 = vector.extract_strided_slice %454 {offsets = [1, 0], sizes = [1, 128], strides = [1, 1]} : vector<4x128xf32> to vector<1x128xf32>
      %459 = vector.broadcast %458 : vector<1x128xf32> to vector<4x128xf32>
      %460 = arith.addf %193, %459 : vector<4x128xf32>
      %461 = vector.extract_strided_slice %454 {offsets = [2, 0], sizes = [1, 128], strides = [1, 1]} : vector<4x128xf32> to vector<1x128xf32>
      %462 = vector.broadcast %461 : vector<1x128xf32> to vector<4x128xf32>
      %463 = arith.addf %198, %462 : vector<4x128xf32>
      %464 = vector.extract_strided_slice %454 {offsets = [3, 0], sizes = [1, 128], strides = [1, 1]} : vector<4x128xf32> to vector<1x128xf32>
      %465 = vector.broadcast %464 : vector<1x128xf32> to vector<4x128xf32>
      %466 = arith.addf %203, %465 : vector<4x128xf32>
      %467 = arith.maximumf %457, %460 : vector<4x128xf32>
      %468 = arith.maximumf %463, %466 : vector<4x128xf32>
      %469 = arith.maximumf %467, %468 : vector<4x128xf32>
      %470 = arith.subf %457, %469 : vector<4x128xf32>
      %471 = math.exp %470 : vector<4x128xf32>
      %472 = arith.subf %460, %469 : vector<4x128xf32>
      %473 = math.exp %472 : vector<4x128xf32>
      %474 = arith.addf %471, %473 : vector<4x128xf32>
      %475 = arith.subf %463, %469 : vector<4x128xf32>
      %476 = math.exp %475 : vector<4x128xf32>
      %477 = arith.subf %466, %469 : vector<4x128xf32>
      %478 = math.exp %477 : vector<4x128xf32>
      %479 = arith.addf %476, %478 : vector<4x128xf32>
      %480 = arith.addf %474, %479 : vector<4x128xf32>
      %481 = math.log %480 : vector<4x128xf32>
      %482 = arith.addf %481, %469 : vector<4x128xf32>
      %cst_34 = arith.constant -1.38629436 : f32
      %483 = vector.broadcast %cst_34 : f32 to vector<4x128xf32>
      %484 = arith.subf %483, %482 : vector<4x128xf32>
      %485 = vector.extract_strided_slice %484 {offsets = [0, 0], sizes = [1, 128], strides = [1, 1]} : vector<4x128xf32> to vector<1x128xf32>
      %486 = vector.broadcast %485 : vector<1x128xf32> to vector<4x128xf32>
      %487 = arith.addf %213, %486 : vector<4x128xf32>
      %488 = vector.extract_strided_slice %484 {offsets = [1, 0], sizes = [1, 128], strides = [1, 1]} : vector<4x128xf32> to vector<1x128xf32>
      %489 = vector.broadcast %488 : vector<1x128xf32> to vector<4x128xf32>
      %490 = arith.addf %219, %489 : vector<4x128xf32>
      %491 = vector.extract_strided_slice %484 {offsets = [2, 0], sizes = [1, 128], strides = [1, 1]} : vector<4x128xf32> to vector<1x128xf32>
      %492 = vector.broadcast %491 : vector<1x128xf32> to vector<4x128xf32>
      %493 = arith.addf %225, %492 : vector<4x128xf32>
      %494 = vector.extract_strided_slice %484 {offsets = [3, 0], sizes = [1, 128], strides = [1, 1]} : vector<4x128xf32> to vector<1x128xf32>
      %495 = vector.broadcast %494 : vector<1x128xf32> to vector<4x128xf32>
      %496 = arith.addf %231, %495 : vector<4x128xf32>
      %497 = arith.maximumf %487, %490 : vector<4x128xf32>
      %498 = arith.maximumf %493, %496 : vector<4x128xf32>
      %499 = arith.maximumf %497, %498 : vector<4x128xf32>
      %500 = arith.subf %487, %499 : vector<4x128xf32>
      %501 = math.exp %500 : vector<4x128xf32>
      %502 = arith.subf %490, %499 : vector<4x128xf32>
      %503 = math.exp %502 : vector<4x128xf32>
      %504 = arith.addf %501, %503 : vector<4x128xf32>
      %505 = arith.subf %493, %499 : vector<4x128xf32>
      %506 = math.exp %505 : vector<4x128xf32>
      %507 = arith.subf %496, %499 : vector<4x128xf32>
      %508 = math.exp %507 : vector<4x128xf32>
      %509 = arith.addf %506, %508 : vector<4x128xf32>
      %510 = arith.addf %504, %509 : vector<4x128xf32>
      %511 = math.log %510 : vector<4x128xf32>
      %512 = arith.addf %511, %499 : vector<4x128xf32>
      %cst_35 = arith.constant -1.38629436 : f32
      %513 = vector.broadcast %cst_35 : f32 to vector<4x128xf32>
      %514 = arith.subf %513, %512 : vector<4x128xf32>
      scf.yield %484, %514 : vector<4x128xf32>, vector<4x128xf32>
    }
    %cst_21 = arith.constant 0.000000e+00 : f32
    %236 = vector.broadcast %cst_21 : f32 to vector<4x128xf32>
    %237 = arith.addf %188, %235#0 : vector<4x128xf32>
    %238 = vector.extract_strided_slice %235#1 {offsets = [0, 0], sizes = [1, 128], strides = [1, 1]} : vector<4x128xf32> to vector<1x128xf32>
    %239 = vector.broadcast %238 : vector<1x128xf32> to vector<4x128xf32>
    %240 = arith.addf %237, %239 : vector<4x128xf32>
    %241 = math.exp %240 : vector<4x128xf32>
    %c0_22 = arith.constant 0 : index
    %242 = memref.load %arg3[%c0_22] : memref<4xf32, #tpu.memory_space<smem>>
    %243 = vector.broadcast %242 : f32 to vector<4x128xf32>
    %244 = arith.mulf %241, %243 : vector<4x128xf32>
    %245 = arith.addf %236, %244 : vector<4x128xf32>
    %246 = arith.addf %193, %235#0 : vector<4x128xf32>
    %247 = vector.extract_strided_slice %235#1 {offsets = [1, 0], sizes = [1, 128], strides = [1, 1]} : vector<4x128xf32> to vector<1x128xf32>
    %248 = vector.broadcast %247 : vector<1x128xf32> to vector<4x128xf32>
    %249 = arith.addf %246, %248 : vector<4x128xf32>
    %250 = math.exp %249 : vector<4x128xf32>
    %c1_23 = arith.constant 1 : index
    %251 = memref.load %arg3[%c1_23] : memref<4xf32, #tpu.memory_space<smem>>
    %252 = vector.broadcast %251 : f32 to vector<4x128xf32>
    %253 = arith.mulf %250, %252 : vector<4x128xf32>
    %254 = arith.addf %245, %253 : vector<4x128xf32>
    %255 = arith.addf %198, %235#0 : vector<4x128xf32>
    %256 = vector.extract_strided_slice %235#1 {offsets = [2, 0], sizes = [1, 128], strides = [1, 1]} : vector<4x128xf32> to vector<1x128xf32>
    %257 = vector.broadcast %256 : vector<1x128xf32> to vector<4x128xf32>
    %258 = arith.addf %255, %257 : vector<4x128xf32>
    %259 = math.exp %258 : vector<4x128xf32>
    %c2_24 = arith.constant 2 : index
    %260 = memref.load %arg3[%c2_24] : memref<4xf32, #tpu.memory_space<smem>>
    %261 = vector.broadcast %260 : f32 to vector<4x128xf32>
    %262 = arith.mulf %259, %261 : vector<4x128xf32>
    %263 = arith.addf %254, %262 : vector<4x128xf32>
    %264 = arith.addf %203, %235#0 : vector<4x128xf32>
    %265 = vector.extract_strided_slice %235#1 {offsets = [3, 0], sizes = [1, 128], strides = [1, 1]} : vector<4x128xf32> to vector<1x128xf32>
    %266 = vector.broadcast %265 : vector<1x128xf32> to vector<4x128xf32>
    %267 = arith.addf %264, %266 : vector<4x128xf32>
    %268 = math.exp %267 : vector<4x128xf32>
    %c3_25 = arith.constant 3 : index
    %269 = memref.load %arg3[%c3_25] : memref<4xf32, #tpu.memory_space<smem>>
    %270 = vector.broadcast %269 : f32 to vector<4x128xf32>
    %271 = arith.mulf %268, %270 : vector<4x128xf32>
    %272 = arith.addf %263, %271 : vector<4x128xf32>
    %273 = arith.addf %162, %272 : vector<4x128xf32>
    %c0_26 = arith.constant 0 : index
    %c0_27 = arith.constant 0 : index
    %274 = vector.load %arg4[%c0_26, %c0_27] : memref<4x128xf32, #tpu.memory_space<vmem>>, vector<4x128xf32>
    tpu.vector_store %arg4[%c0_26, %c0_27], %273 {strides = array<i32>} : memref<4x128xf32, #tpu.memory_space<vmem>>, vector<4x128xf32>,
    return
  }
  func.func @transform_0(%arg0: i32) -> (i32, i32) {
    %c0_i32 = arith.constant 0 : i32
    %c0_i32_0 = arith.constant 0 : i32
    return %c0_i32, %arg0 : i32, i32
  }
  func.func @transform_1(%arg0: i32) -> i32 {
    %c0_i32 = arith.constant 0 : i32
    %c0_i32_0 = arith.constant 0 : i32
    return %c0_i32 : i32
  }
  func.func @transform_2(%arg0: i32) -> i32 {
    %c0_i32 = arith.constant 0 : i32
    %c0_i32_0 = arith.constant 0 : i32
    return %c0_i32 : i32
  }
  func.func @transform_3(%arg0: i32) -> (i32, i32) {
    %c0_i32 = arith.constant 0 : i32
    %c0_i32_0 = arith.constant 0 : i32
    return %c0_i32, %arg0 : i32, i32
  }
}

</mosaic_0001>

<llo_original>
// kernel: tpu_custom_call.1
$region0: #{tpu_custom_call.1}
  #allocation0 [shape = 'u32[]', space=smem, size = 0x4, offset = 0x4, fixed_abs, tag = 'smem constant byte address 0x4 - core index']
  #allocation1 [shape = 'u32[144,128]{1,0:T(1,128)}', space=vmem, size = 0x12000, scoped, tag = 'internal scratch']
  %s0 = inlined_call_operand.hbm [shape: s32[4,128], index: 0, kind: input, shape index: {}]
  %s1 = inlined_call_operand.vmem [shape: f32[30], index: 1, kind: input, shape index: {}]
  %s2 = inlined_call_operand.vmem [shape: f32[4], index: 2, kind: input, shape index: {}]
  %s3 = inlined_call_operand.hbm [shape: f32[4,128], index: 3, kind: output, shape index: {}]
  %s4 = sld [smem:[#allocation0]]
  $region41: #{tpu_custom_call.1} parent=0
    _
  %s6 = ssub.s32 1, %s4
  %s7 = scalar_select 0, %s6, %s4
  $region1: #{tpu_custom_call.1} parent=0
    #allocation2 [shape = 'u8[2048]{0}', space=vmem, size = 0x800, scoped, tag = 'input window, operand 0, single buffered']
    #allocation3 [shape = 's32[1]{0}', space=sflag, size = 0x4, scoped, tag = 'scoped memory for tpu_custom_call.1']
    #allocation4 [shape = 's32[1]{0}', space=sflag, size = 0x4, scoped, tag = 'scoped memory for tpu_custom_call.1']
    #allocation5 [shape = 's32[1]{0}', space=sflag, size = 0x4, scoped, tag = 'scoped memory for tpu_custom_call.1']
    #allocation6 [shape = 'u8[512]{0}', space=smem, size = 0x200, scoped, tag = 'input window, operand 1, single buffered']
    #allocation7 [shape = 'u8[512]{0}', space=smem, size = 0x200, scoped, tag = 'input window, operand 2, single buffered']
    #allocation8 [shape = 's32[1]{0}', space=sflag, size = 0x4, scoped, tag = 'scoped memory for tpu_custom_call.1']
    #allocation9 [shape = 'u8[2048]{0}', space=vmem, size = 0x800, scoped, tag = 'output window, operand 0, single buffered']
    %8 = vsyncpa [#allocation3], 0
    %9 = vsyncpa [#allocation5], 0
    %10 = vsyncpa [#allocation8], 0
    %11 = vsyncpa [#allocation4], 0
    // Predicated region
    $region2: #{tpu_custom_call.1} parent=1 // pred_check
      _
    $region3: #{tpu_custom_call.1} parent=1 // pred_check_branch
      %13 = sbr.rel (0) target = $region5
    $region4: #{tpu_custom_call.1} parent=1 // pred_region
      %s15 = ssub.s32 64, 64
      %16 = vsyncadd [#allocation3], %s15
      %s18 = sshll.u32 [#allocation2], 4
      %s19 = int_to_ptr.vmem [resolvable:$true] %s18
      %21 = dma.hbm_to_vmem [thread:$0]  %s0, 64, %s19, [#allocation3]
    $region5: #{tpu_custom_call.1} parent=1 // pred_fallthru
      _
    // Predicated region
    $region6: #{tpu_custom_call.1} parent=1 // pred_check
      _
    $region7: #{tpu_custom_call.1} parent=1 // pred_check_branch
      %23 = sbr.rel (0) target = $region9
    $region8: #{tpu_custom_call.1} parent=1 // pred_region
      %s25 = ssub.s32 16, 16
      %26 = vsyncadd [#allocation5], %s25
      %s28 = sshll.u32 %s1, 4
      %s29 = int_to_ptr.vmem [resolvable:$true] %s28
      %31 = dma.vmem_to_smem %s29, 16, [#allocation6], [#allocation5]
    $region9: #{tpu_custom_call.1} parent=1 // pred_fallthru
      _
    // Predicated region
    $region10: #{tpu_custom_call.1} parent=1 // pred_check
      _
    $region11: #{tpu_custom_call.1} parent=1 // pred_check_branch
      %33 = sbr.rel (0) target = $region13
    $region12: #{tpu_custom_call.1} parent=1 // pred_region
      %s35 = ssub.s32 16, 16
      %36 = vsyncadd [#allocation8], %s35
      %s38 = sshll.u32 %s2, 4
      %s39 = int_to_ptr.vmem [resolvable:$true] %s38
      %41 = dma.vmem_to_smem %s39, 16, [#allocation7], [#allocation8]
    $region13: #{tpu_custom_call.1} parent=1 // pred_fallthru
      _
    // Predicated region
    $region14: #{tpu_custom_call.1} parent=1 // pred_check
      _
    $region15: #{tpu_custom_call.1} parent=1 // pred_check_branch
      %43 = sbr.rel (0) target = $region17
    $region16: #{tpu_custom_call.1} parent=1 // pred_region
      %44 = dma.done [#allocation3], 64
    $region17: #{tpu_custom_call.1} parent=1 // pred_fallthru
      _
    // Predicated region
    $region18: #{tpu_custom_call.1} parent=1 // pred_check
      _
    $region19: #{tpu_custom_call.1} parent=1 // pred_check_branch
      %46 = sbr.rel (0) target = $region21
    $region20: #{tpu_custom_call.1} parent=1 // pred_region
      %47 = dma.done [#allocation5], 16
    $region21: #{tpu_custom_call.1} parent=1 // pred_fallthru
      _
    // Predicated region
    $region22: #{tpu_custom_call.1} parent=1 // pred_check
      _
    $region23: #{tpu_custom_call.1} parent=1 // pred_check_branch
      %49 = sbr.rel (0) target = $region25
    $region24: #{tpu_custom_call.1} parent=1 // pred_region
      %50 = dma.done [#allocation8], 16
    $region25: #{tpu_custom_call.1} parent=1 // pred_fallthru
      _
    %51 = sfence
    %v52 = vld [vmem:[#allocation2] sm:$0xf]
    %vm53 = vcmp.eq.s32.totalorder %v52, 0
    %s54 = sld [smem:[#allocation6]]
    %v55 = vstv %s54
    %v56 = vsel %vm53, %v55, 0.0
    %vm57 = vcmp.eq.s32.totalorder %v52, 1
    %s58 = sld [smem:[#allocation6 + $0x1]]
    %v59 = vstv %s58
    %v60 = vsel %vm57, %v59, %v56
    %vm61 = vcmp.eq.s32.totalorder %v52, 2
    %s62 = sld [smem:[#allocation6 + $0x2]]
    %v63 = vstv %s62
    %v64 = vsel %vm61, %v63, %v60
    %vm65 = vcmp.eq.s32.totalorder %v52, 3
    %s66 = sld [smem:[#allocation6 + $0x3]]
    %v67 = vstv %s66
    %v68 = vsel %vm65, %v67, %v64
    %vm69 = vcmp.eq.s32.totalorder %v52, 4
    %s70 = sld [smem:[#allocation6 + $0x4]]
    %v71 = vstv %s70
    %v72 = vsel %vm69, %v71, %v68
    %vm73 = vcmp.eq.s32.totalorder %v52, 5
    %s74 = sld [smem:[#allocation6 + $0x5]]
    %v75 = vstv %s74
    %v76 = vsel %vm73, %v75, %v72
    %vm77 = vcmp.eq.s32.totalorder %v52, 6
    %s78 = sld [smem:[#allocation6 + $0x6]]
    %v79 = vstv %s78
    %v80 = vsel %vm77, %v79, %v76
    %vm81 = vcmp.eq.s32.totalorder %v52, 7
    %s82 = sld [smem:[#allocation6 + $0x7]]
    %v83 = vstv %s82
    %v84 = vsel %vm81, %v83, %v80
    %vm85 = vcmp.eq.s32.totalorder %v52, 8
    %s86 = sld [smem:[#allocation6 + $0x8]]
    %v87 = vstv %s86
    %v88 = vsel %vm85, %v87, %v84
    %vm89 = vcmp.eq.s32.totalorder %v52, 9
    %s90 = sld [smem:[#allocation6 + $0x9]]
    %v91 = vstv %s90
    %v92 = vsel %vm89, %v91, %v88
    %vm93 = vcmp.eq.s32.totalorder %v52, 10
    %s94 = sld [smem:[#allocation6 + $0xa]]
    %v95 = vstv %s94
    %v96 = vsel %vm93, %v95, %v92
    %vm97 = vcmp.eq.s32.totalorder %v52, 11
    %s98 = sld [smem:[#allocation6 + $0xb]]
    %v99 = vstv %s98
    %v100 = vsel %vm97, %v99, %v96
    %vm101 = vcmp.eq.s32.totalorder %v52, 12
    %s102 = sld [smem:[#allocation6 + $0xc]]
    %v103 = vstv %s102
    %v104 = vsel %vm101, %v103, %v100
    %vm105 = vcmp.eq.s32.totalorder %v52, 13
    %s106 = sld [smem:[#allocation6 + $0xd]]
    %v107 = vstv %s106
    %v108 = vsel %vm105, %v107, %v104
    %vm109 = vcmp.eq.s32.totalorder %v52, 14
    %s110 = sld [smem:[#allocation6 + $0xe]]
    %v111 = vstv %s110
    %v112 = vsel %vm109, %v111, %v108
    %vm113 = vcmp.eq.s32.totalorder %v52, 15
    %s114 = sld [smem:[#allocation6 + $0xf]]
    %v115 = vstv %s114
    %v116 = vsel %vm113, %v115, %v112
    %vm117 = vcmp.eq.s32.totalorder %v52, 16
    %s118 = sld [smem:[#allocation6 + $0x10]]
    %v119 = vstv %s118
    %v120 = vsel %vm117, %v119, %v116
    %vm121 = vcmp.eq.s32.totalorder %v52, 17
    %s122 = sld [smem:[#allocation6 + $0x11]]
    %v123 = vstv %s122
    %v124 = vsel %vm121, %v123, %v120
    %vm125 = vcmp.eq.s32.totalorder %v52, 18
    %s126 = sld [smem:[#allocation6 + $0x12]]
    %v127 = vstv %s126
    %v128 = vsel %vm125, %v127, %v124
    %vm129 = vcmp.eq.s32.totalorder %v52, 19
    %s130 = sld [smem:[#allocation6 + $0x13]]
    %v131 = vstv %s130
    %v132 = vsel %vm129, %v131, %v128
    %vm133 = vcmp.eq.s32.totalorder %v52, 20
    %s134 = sld [smem:[#allocation6 + $0x14]]
    %v135 = vstv %s134
    %v136 = vsel %vm133, %v135, %v132
    %vm137 = vcmp.eq.s32.totalorder %v52, 21
    %s138 = sld [smem:[#allocation6 + $0x15]]
    %v139 = vstv %s138
    %v140 = vsel %vm137, %v139, %v136
    %vm141 = vcmp.eq.s32.totalorder %v52, 22
    %s142 = sld [smem:[#allocation6 + $0x16]]
    %v143 = vstv %s142
    %v144 = vsel %vm141, %v143, %v140
    %vm145 = vcmp.eq.s32.totalorder %v52, 23
    %s146 = sld [smem:[#allocation6 + $0x17]]
    %v147 = vstv %s146
    %v148 = vsel %vm145, %v147, %v144
    %vm149 = vcmp.eq.s32.totalorder %v52, 24
    %s150 = sld [smem:[#allocation6 + $0x18]]
    %v151 = vstv %s150
    %v152 = vsel %vm149, %v151, %v148
    %vm153 = vcmp.eq.s32.totalorder %v52, 25
    %s154 = sld [smem:[#allocation6 + $0x19]]
    %v155 = vstv %s154
    %v156 = vsel %vm153, %v155, %v152
    %vm157 = vcmp.eq.s32.totalorder %v52, 26
    %s158 = sld [smem:[#allocation6 + $0x1a]]
    %v159 = vstv %s158
    %v160 = vsel %vm157, %v159, %v156
    %vm161 = vcmp.eq.s32.totalorder %v52, 27
    %s162 = sld [smem:[#allocation6 + $0x1b]]
    %v163 = vstv %s162
    %v164 = vsel %vm161, %v163, %v160
    %vm165 = vcmp.eq.s32.totalorder %v52, 28
    %s166 = sld [smem:[#allocation6 + $0x1c]]
    %v167 = vstv %s166
    %v168 = vsel %vm165, %v167, %v164
    %vm169 = vcmp.eq.s32.totalorder %v52, 29
    %s170 = sld [smem:[#allocation6 + $0x1d]]
    %v171 = vstv %s170
    %v172 = vsel %vm169, %v171, %v168
    %v174 = vrot.slane %v172, 1
    %v176 = vadd.f32 %v172, %v174
    %v178 = vrot.slane %v176, 2
    %v180 = vadd.f32 %v176, %v178
    %v181 = vmul.f32 %v172, 4.0
    %v182 = vlaneseq
    %v183 = vshrl.u32 %v182, 7
    %v184 = vsub.s32 0, %v183
    %v185 = vrot.slane %v180, %v184
    %v186 = vsub.f32 %v181, %v185
    %v188 = vrot.slane %v186, 1
    %v190 = vmin.f32 %v186, %v188
    %v192 = vrot.slane %v190, 2
    %v194 = vmin.f32 %v190, %v192
    %v195 = vmax.f32 %v186, %v188
    %v197 = vrot.slane %v195, 2
    %v199 = vmax.f32 %v195, %v197
    %v200 = vlaneseq
    %v201 = vshrl.u32 %v200, 7
    %v202 = vsub.s32 0, %v201
    %v203 = vrot.slane %v194, %v202
    %v204 = vsub.f32 %v186, %v203
    %v205 = vsub.f32 %v199, %v194
    %v206 = vadd.f32 %v205, 1e-06
    %v207 = vlaneseq
    %v208 = vshrl.u32 %v207, 7
    %v209 = vsub.s32 0, %v208
    %v210 = vrot.slane %v206, %v209
    %v211 = vrcp.pop %v210
    %v212 = vmul.f32 %v204, %v211
    %v213 = vmul.f32 %v212, %v212
    %v214 = vmul.f32 %v213, -1000.0
    %v215 = vsub.f32 %v212, 0.33333334
    %v216 = vmul.f32 %v215, %v215
    %v217 = vmul.f32 %v216, -1000.0
    %v218 = vsub.f32 %v212, 0.6666667
    %v219 = vmul.f32 %v218, %v218
    %v220 = vmul.f32 %v219, -1000.0
    %v221 = vsub.f32 %v212, 1.0
    %v222 = vmul.f32 %v221, %v221
    %v223 = vmul.f32 %v222, -1000.0
    %v224 = vlaneseq
    %v225 = vshrl.u32 %v224, 7
    %v226 = vcvt.s32.f32 %v225
    %v227 = vmul.f32 %v226, 0.33333334
    %v228 = vlaneseq
    %v229 = vshrl.u32 %v228, 7
    %v230 = vsub.s32 0, %v229
    %v231 = vrot.slane %v212, %v230
    %v232 = vsub.f32 %v231, %v227
    %v233 = vmul.f32 %v232, %v232
    %v234 = vmul.f32 %v233, -1000.0
    %v235 = vlaneseq
    %v236 = vshrl.u32 %v235, 7
    %v237 = vsub.s32 1, %v236
    %v238 = vrot.slane %v212, %v237
    %v239 = vsub.f32 %v238, %v227
    %v240 = vmul.f32 %v239, %v239
    %v241 = vmul.f32 %v240, -1000.0
    %v242 = vlaneseq
    %v243 = vshrl.u32 %v242, 7
    %v244 = vsub.s32 2, %v243
    %v245 = vrot.slane %v212, %v244
    %v246 = vsub.f32 %v245, %v227
    %v247 = vmul.f32 %v246, %v246
    %v248 = vmul.f32 %v247, -1000.0
    %v249 = vlaneseq
    %v250 = vshrl.u32 %v249, 7
    %v251 = vsub.s32 3, %v250
    %v252 = vrot.slane %v212, %v251
    %v253 = vsub.f32 %v252, %v227
    %v254 = vmul.f32 %v253, %v253
    %v255 = vmul.f32 %v254, -1000.0
    loop: start=0, step=1, limit=250
    $region26: #{tpu_custom_call.1} parent=1 // loop_pre_header
      _
    $region27: #{tpu_custom_call.1} parent=1 // loop_header
      %s257 = sphi 0, %s261
      %p258 = scmp.ge.s32.totalorder %s257, 250
      %v262 = vphi 0.0, %v557
      %v263 = vphi 0.0, %v599
    $region28: #{tpu_custom_call.1} parent=1 // loop_header_branch
      %260 = sbr.rel (%p258) target = $region32
    $region29: #{tpu_custom_call.1} parent=1 // loop_body
      %v264 = vlaneseq
      %v265 = vshrl.u32 %v264, 7
      %v266 = vsub.s32 0, %v265
      %v267 = vrot.slane %v263, %v266
      %v268 = vadd.f32 %v214, %v267
      %v269 = vlaneseq
      %v270 = vshrl.u32 %v269, 7
      %v271 = vsub.s32 1, %v270
      %v272 = vrot.slane %v263, %v271
      %v273 = vadd.f32 %v217, %v272
      %v274 = vlaneseq
      %v275 = vshrl.u32 %v274, 7
      %v276 = vsub.s32 2, %v275
      %v277 = vrot.slane %v263, %v276
      %v278 = vadd.f32 %v220, %v277
      %v279 = vlaneseq
      %v280 = vshrl.u32 %v279, 7
      %v281 = vsub.s32 3, %v280
      %v282 = vrot.slane %v263, %v281
      %v283 = vadd.f32 %v223, %v282
      %v284 = vmax.f32 %v268, %v273
      %v285 = vmax.f32 %v278, %v283
      %v286 = vmax.f32 %v284, %v285
      %v287 = vsub.f32 %v268, %v286
      %v288 = vmul.f32 %v287, 1.442695
      %v289 = vpow.pop %v288
      %v290 = vsub.f32 %v273, %v286
      %v291 = vmul.f32 %v290, 1.442695
      %v292 = vpow.pop %v291
      %v293 = vadd.f32 %v289, %v292
      %v294 = vsub.f32 %v278, %v286
      %v295 = vmul.f32 %v294, 1.442695
      %v296 = vpow.pop %v295
      %v297 = vsub.f32 %v283, %v286
      %v298 = vmul.f32 %v297, 1.442695
      %v299 = vpow.pop %v298
      %v300 = vadd.f32 %v296, %v299
      %v301 = vadd.f32 %v293, %v300
      %v302 = vlog2.pop %v301
      %v303 = vmul.f32 %v302, 0.6931472
      %v304 = vadd.f32 %v303, %v286
      %v305 = vsub.f32 -1.3862944, %v304
      %v306 = vlaneseq
      %v307 = vshrl.u32 %v306, 7
      %v308 = vsub.s32 0, %v307
      %v309 = vrot.slane %v305, %v308
      %v310 = vadd.f32 %v234, %v309
      %v311 = vlaneseq
      %v312 = vshrl.u32 %v311, 7
      %v313 = vsub.s32 1, %v312
      %v314 = vrot.slane %v305, %v313
      %v315 = vadd.f32 %v241, %v314
      %v316 = vlaneseq
      %v317 = vshrl.u32 %v316, 7
      %v318 = vsub.s32 2, %v317
      %v319 = vrot.slane %v305, %v318
      %v320 = vadd.f32 %v248, %v319
      %v321 = vlaneseq
      %v322 = vshrl.u32 %v321, 7
      %v323 = vsub.s32 3, %v322
      %v324 = vrot.slane %v305, %v323
      %v325 = vadd.f32 %v255, %v324
      %v326 = vmax.f32 %v310, %v315
      %v327 = vmax.f32 %v320, %v325
      %v328 = vmax.f32 %v326, %v327
      %v329 = vsub.f32 %v310, %v328
      %v330 = vmul.f32 %v329, 1.442695
      %v331 = vpow.pop %v330
      %v332 = vsub.f32 %v315, %v328
      %v333 = vmul.f32 %v332, 1.442695
      %v334 = vpow.pop %v333
      %v335 = vadd.f32 %v331, %v334
      %v336 = vsub.f32 %v320, %v328
      %v337 = vmul.f32 %v336, 1.442695
      %v338 = vpow.pop %v337
      %v339 = vsub.f32 %v325, %v328
      %v340 = vmul.f32 %v339, 1.442695
      %v341 = vpow.pop %v340
      %v342 = vadd.f32 %v338, %v341
      %v343 = vadd.f32 %v335, %v342
      %v344 = vlog2.pop %v343
      %v345 = vmul.f32 %v344, 0.6931472
      %v346 = vadd.f32 %v345, %v328
      %v347 = vsub.f32 -1.3862944, %v346
      %v348 = vlaneseq
      %v349 = vshrl.u32 %v348, 7
      %v350 = vsub.s32 0, %v349
      %v351 = vrot.slane %v347, %v350
      %v352 = vadd.f32 %v214, %v351
      %v353 = vlaneseq
      %v354 = vshrl.u32 %v353, 7
      %v355 = vsub.s32 1, %v354
      %v356 = vrot.slane %v347, %v355
      %v357 = vadd.f32 %v217, %v356
      %v358 = vlaneseq
      %v359 = vshrl.u32 %v358, 7
      %v360 = vsub.s32 2, %v359
      %v361 = vrot.slane %v347, %v360
      %v362 = vadd.f32 %v220, %v361
      %v363 = vlaneseq
      %v364 = vshrl.u32 %v363, 7
      %v365 = vsub.s32 3, %v364
      %v366 = vrot.slane %v347, %v365
      %v367 = vadd.f32 %v223, %v366
      %v368 = vmax.f32 %v352, %v357
      %v369 = vmax.f32 %v362, %v367
      %v370 = vmax.f32 %v368, %v369
      %v371 = vsub.f32 %v352, %v370
      %v372 = vmul.f32 %v371, 1.442695
      %v373 = vpow.pop %v372
      %v374 = vsub.f32 %v357, %v370
      %v375 = vmul.f32 %v374, 1.442695
      %v376 = vpow.pop %v375
      %v377 = vadd.f32 %v373, %v376
      %v378 = vsub.f32 %v362, %v370
      %v379 = vmul.f32 %v378, 1.442695
      %v380 = vpow.pop %v379
      %v381 = vsub.f32 %v367, %v370
      %v382 = vmul.f32 %v381, 1.442695
      %v383 = vpow.pop %v382
      %v384 = vadd.f32 %v380, %v383
      %v385 = vadd.f32 %v377, %v384
      %v386 = vlog2.pop %v385
      %v387 = vmul.f32 %v386, 0.6931472
      %v388 = vadd.f32 %v387, %v370
      %v389 = vsub.f32 -1.3862944, %v388
      %v390 = vlaneseq
      %v391 = vshrl.u32 %v390, 7
      %v392 = vsub.s32 0, %v391
      %v393 = vrot.slane %v389, %v392
      %v394 = vadd.f32 %v234, %v393
      %v395 = vlaneseq
      %v396 = vshrl.u32 %v395, 7
      %v397 = vsub.s32 1, %v396
      %v398 = vrot.slane %v389, %v397
      %v399 = vadd.f32 %v241, %v398
      %v400 = vlaneseq
      %v401 = vshrl.u32 %v400, 7
      %v402 = vsub.s32 2, %v401
      %v403 = vrot.slane %v389, %v402
      %v404 = vadd.f32 %v248, %v403
      %v405 = vlaneseq
      %v406 = vshrl.u32 %v405, 7
      %v407 = vsub.s32 3, %v406
      %v408 = vrot.slane %v389, %v407
      %v409 = vadd.f32 %v255, %v408
      %v410 = vmax.f32 %v394, %v399
      %v411 = vmax.f32 %v404, %v409
      %v412 = vmax.f32 %v410, %v411
      %v413 = vsub.f32 %v394, %v412
      %v414 = vmul.f32 %v413, 1.442695
      %v415 = vpow.pop %v414
      %v416 = vsub.f32 %v399, %v412
      %v417 = vmul.f32 %v416, 1.442695
      %v418 = vpow.pop %v417
      %v419 = vadd.f32 %v415, %v418
      %v420 = vsub.f32 %v404, %v412
      %v421 = vmul.f32 %v420, 1.442695
      %v422 = vpow.pop %v421
      %v423 = vsub.f32 %v409, %v412
      %v424 = vmul.f32 %v423, 1.442695
      %v425 = vpow.pop %v424
      %v426 = vadd.f32 %v422, %v425
      %v427 = vadd.f32 %v419, %v426
      %v428 = vlog2.pop %v427
      %v429 = vmul.f32 %v428, 0.6931472
      %v430 = vadd.f32 %v429, %v412
      %v431 = vsub.f32 -1.3862944, %v430
      %v432 = vlaneseq
      %v433 = vshrl.u32 %v432, 7
      %v434 = vsub.s32 0, %v433
      %v435 = vrot.slane %v431, %v434
      %v436 = vadd.f32 %v214, %v435
      %v437 = vlaneseq
      %v438 = vshrl.u32 %v437, 7
      %v439 = vsub.s32 1, %v438
      %v440 = vrot.slane %v431, %v439
      %v441 = vadd.f32 %v217, %v440
      %v442 = vlaneseq
      %v443 = vshrl.u32 %v442, 7
      %v444 = vsub.s32 2, %v443
      %v445 = vrot.slane %v431, %v444
      %v446 = vadd.f32 %v220, %v445
      %v447 = vlaneseq
      %v448 = vshrl.u32 %v447, 7
      %v449 = vsub.s32 3, %v448
      %v450 = vrot.slane %v431, %v449
      %v451 = vadd.f32 %v223, %v450
      %v452 = vmax.f32 %v436, %v441
      %v453 = vmax.f32 %v446, %v451
      %v454 = vmax.f32 %v452, %v453
      %v455 = vsub.f32 %v436, %v454
      %v456 = vmul.f32 %v455, 1.442695
      %v457 = vpow.pop %v456
      %v458 = vsub.f32 %v441, %v454
      %v459 = vmul.f32 %v458, 1.442695
      %v460 = vpow.pop %v459
      %v461 = vadd.f32 %v457, %v460
      %v462 = vsub.f32 %v446, %v454
      %v463 = vmul.f32 %v462, 1.442695
      %v464 = vpow.pop %v463
      %v465 = vsub.f32 %v451, %v454
      %v466 = vmul.f32 %v465, 1.442695
      %v467 = vpow.pop %v466
      %v468 = vadd.f32 %v464, %v467
      %v469 = vadd.f32 %v461, %v468
      %v470 = vlog2.pop %v469
      %v471 = vmul.f32 %v470, 0.6931472
      %v472 = vadd.f32 %v471, %v454
      %v473 = vsub.f32 -1.3862944, %v472
      %v474 = vlaneseq
      %v475 = vshrl.u32 %v474, 7
      %v476 = vsub.s32 0, %v475
      %v477 = vrot.slane %v473, %v476
      %v478 = vadd.f32 %v234, %v477
      %v479 = vlaneseq
      %v480 = vshrl.u32 %v479, 7
      %v481 = vsub.s32 1, %v480
      %v482 = vrot.slane %v473, %v481
      %v483 = vadd.f32 %v241, %v482
      %v484 = vlaneseq
      %v485 = vshrl.u32 %v484, 7
      %v486 = vsub.s32 2, %v485
      %v487 = vrot.slane %v473, %v486
      %v488 = vadd.f32 %v248, %v487
      %v489 = vlaneseq
      %v490 = vshrl.u32 %v489, 7
      %v491 = vsub.s32 3, %v490
      %v492 = vrot.slane %v473, %v491
      %v493 = vadd.f32 %v255, %v492
      %v494 = vmax.f32 %v478, %v483
      %v495 = vmax.f32 %v488, %v493
      %v496 = vmax.f32 %v494, %v495
      %v497 = vsub.f32 %v478, %v496
      %v498 = vmul.f32 %v497, 1.442695
      %v499 = vpow.pop %v498
      %v500 = vsub.f32 %v483, %v496
      %v501 = vmul.f32 %v500, 1.442695
      %v502 = vpow.pop %v501
      %v503 = vadd.f32 %v499, %v502
      %v504 = vsub.f32 %v488, %v496
      %v505 = vmul.f32 %v504, 1.442695
      %v506 = vpow.pop %v505
      %v507 = vsub.f32 %v493, %v496
      %v508 = vmul.f32 %v507, 1.442695
      %v509 = vpow.pop %v508
      %v510 = vadd.f32 %v506, %v509
      %v511 = vadd.f32 %v503, %v510
      %v512 = vlog2.pop %v511
      %v513 = vmul.f32 %v512, 0.6931472
      %v514 = vadd.f32 %v513, %v496
      %v515 = vsub.f32 -1.3862944, %v514
      %v516 = vlaneseq
      %v517 = vshrl.u32 %v516, 7
      %v518 = vsub.s32 0, %v517
      %v519 = vrot.slane %v515, %v518
      %v520 = vadd.f32 %v214, %v519
      %v521 = vlaneseq
      %v522 = vshrl.u32 %v521, 7
      %v523 = vsub.s32 1, %v522
      %v524 = vrot.slane %v515, %v523
      %v525 = vadd.f32 %v217, %v524
      %v526 = vlaneseq
      %v527 = vshrl.u32 %v526, 7
      %v528 = vsub.s32 2, %v527
      %v529 = vrot.slane %v515, %v528
      %v530 = vadd.f32 %v220, %v529
      %v531 = vlaneseq
      %v532 = vshrl.u32 %v531, 7
      %v533 = vsub.s32 3, %v532
      %v534 = vrot.slane %v515, %v533
      %v535 = vadd.f32 %v223, %v534
      %v536 = vmax.f32 %v520, %v525
      %v537 = vmax.f32 %v530, %v535
      %v538 = vmax.f32 %v536, %v537
      %v539 = vsub.f32 %v520, %v538
      %v540 = vmul.f32 %v539, 1.442695
      %v541 = vpow.pop %v540
      %v542 = vsub.f32 %v525, %v538
      %v543 = vmul.f32 %v542, 1.442695
      %v544 = vpow.pop %v543
      %v545 = vadd.f32 %v541, %v544
      %v546 = vsub.f32 %v530, %v538
      %v547 = vmul.f32 %v546, 1.442695
      %v548 = vpow.pop %v547
      %v549 = vsub.f32 %v535, %v538
      %v550 = vmul.f32 %v549, 1.442695
      %v551 = vpow.pop %v550
      %v552 = vadd.f32 %v548, %v551
      %v553 = vadd.f32 %v545, %v552
      %v554 = vlog2.pop %v553
      %v555 = vmul.f32 %v554, 0.6931472
      %v556 = vadd.f32 %v555, %v538
      %v557 = vsub.f32 -1.3862944, %v556
      %v558 = vlaneseq
      %v559 = vshrl.u32 %v558, 7
      %v560 = vsub.s32 0, %v559
      %v561 = vrot.slane %v557, %v560
      %v562 = vadd.f32 %v234, %v561
      %v563 = vlaneseq
      %v564 = vshrl.u32 %v563, 7
      %v565 = vsub.s32 1, %v564
      %v566 = vrot.slane %v557, %v565
      %v567 = vadd.f32 %v241, %v566
      %v568 = vlaneseq
      %v569 = vshrl.u32 %v568, 7
      %v570 = vsub.s32 2, %v569
      %v571 = vrot.slane %v557, %v570
      %v572 = vadd.f32 %v248, %v571
      %v573 = vlaneseq
      %v574 = vshrl.u32 %v573, 7
      %v575 = vsub.s32 3, %v574
      %v576 = vrot.slane %v557, %v575
      %v577 = vadd.f32 %v255, %v576
      %v578 = vmax.f32 %v562, %v567
      %v579 = vmax.f32 %v572, %v577
      %v580 = vmax.f32 %v578, %v579
      %v581 = vsub.f32 %v562, %v580
      %v582 = vmul.f32 %v581, 1.442695
      %v583 = vpow.pop %v582
      %v584 = vsub.f32 %v567, %v580
      %v585 = vmul.f32 %v584, 1.442695
      %v586 = vpow.pop %v585
      %v587 = vadd.f32 %v583, %v586
      %v588 = vsub.f32 %v572, %v580
      %v589 = vmul.f32 %v588, 1.442695
      %v590 = vpow.pop %v589
      %v591 = vsub.f32 %v577, %v580
      %v592 = vmul.f32 %v591, 1.442695
      %v593 = vpow.pop %v592
      %v594 = vadd.f32 %v590, %v593
      %v595 = vadd.f32 %v587, %v594
      %v596 = vlog2.pop %v595
      %v597 = vmul.f32 %v596, 0.6931472
      %v598 = vadd.f32 %v597, %v580
      %v599 = vsub.f32 -1.3862944, %v598
    $region30: #{tpu_custom_call.1} parent=1 // loop_footer
      %s261 = sadd.s32 1, %s257
    $region31: #{tpu_custom_call.1} parent=1 // loop_footer_branch
      %256 = sbr.rel target = $region27
    $region32: #{tpu_custom_call.1} parent=1 // loop_exit
      _
    %v600 = vadd.f32 %v214, %v262
    %v601 = vlaneseq
    %v602 = vshrl.u32 %v601, 7
    %v603 = vsub.s32 0, %v602
    %v604 = vrot.slane %v263, %v603
    %v605 = vadd.f32 %v600, %v604
    %v606 = vmul.f32 %v605, 1.442695
    %v607 = vpow.pop %v606
    %s608 = sld [smem:[#allocation7]]
    %v609 = vstv %s608
    %v610 = vmul.f32 %v607, %v609
    %v611 = vadd.f32 %v610, 0.0
    %v612 = vadd.f32 %v217, %v262
    %v613 = vlaneseq
    %v614 = vshrl.u32 %v613, 7
    %v615 = vsub.s32 1, %v614
    %v616 = vrot.slane %v263, %v615
    %v617 = vadd.f32 %v612, %v616
    %v618 = vmul.f32 %v617, 1.442695
    %v619 = vpow.pop %v618
    %s620 = sld [smem:[#allocation7 + $0x1]]
    %v621 = vstv %s620
    %v622 = vmul.f32 %v619, %v621
    %v623 = vadd.f32 %v611, %v622
    %v624 = vadd.f32 %v220, %v262
    %v625 = vlaneseq
    %v626 = vshrl.u32 %v625, 7
    %v627 = vsub.s32 2, %v626
    %v628 = vrot.slane %v263, %v627
    %v629 = vadd.f32 %v624, %v628
    %v630 = vmul.f32 %v629, 1.442695
    %v631 = vpow.pop %v630
    %s632 = sld [smem:[#allocation7 + $0x2]]
    %v633 = vstv %s632
    %v634 = vmul.f32 %v631, %v633
    %v635 = vadd.f32 %v623, %v634
    %v636 = vadd.f32 %v223, %v262
    %v637 = vlaneseq
    %v638 = vshrl.u32 %v637, 7
    %v639 = vsub.s32 3, %v638
    %v640 = vrot.slane %v263, %v639
    %v641 = vadd.f32 %v636, %v640
    %v642 = vmul.f32 %v641, 1.442695
    %v643 = vpow.pop %v642
    %s644 = sld [smem:[#allocation7 + $0x3]]
    %v645 = vstv %s644
    %v646 = vmul.f32 %v643, %v645
    %v647 = vadd.f32 %v635, %v646
    %v648 = vadd.f32 %v186, %v647
    %649 = vst [vmem:[#allocation9] sm:$0xf] %v648
    // Predicated region
    $region33: #{tpu_custom_call.1} parent=1 // pred_check
      _
    $region34: #{tpu_custom_call.1} parent=1 // pred_check_branch
      %651 = sbr.rel (0) target = $region36
    $region35: #{tpu_custom_call.1} parent=1 // pred_region
      %s653 = ssub.s32 64, 64
      %654 = vsyncadd [#allocation4], %s653
      %s656 = sshll.u32 [#allocation9], 4
      %s657 = int_to_ptr.vmem [resolvable:$true] %s656
      %659 = dma.vmem_to_hbm [thread:$0]  %s657, 64, %s3, [#allocation4]
    $region36: #{tpu_custom_call.1} parent=1 // pred_fallthru
      _
    // Predicated region
    $region37: #{tpu_custom_call.1} parent=1 // pred_check
      _
    $region38: #{tpu_custom_call.1} parent=1 // pred_check_branch
      %661 = sbr.rel (0) target = $region40
    $region39: #{tpu_custom_call.1} parent=1 // pred_region
      %662 = dma.done [#allocation4], 64
    $region40: #{tpu_custom_call.1} parent=1 // pred_fallthru
      _
    %663 = vsyncpa [#allocation3], 1
    %664 = vsyncpa [#allocation4], 1
    %665 = vsyncpa [#allocation5], 1
    %666 = vsyncpa [#allocation8], 1

</llo_original>
